<compile_context>
chip_gen: v7x
topology: tpu7x:2x2x1
jax: 0.10.0
libtpu: 0.0.40
codegen_flags: <defaults>
</compile_context>

<pallas_src>
import functools
import math

import jax
import jax.numpy as jnp
from jax.experimental import pallas as pl
from jax.experimental.pallas import tpu as pltpu

TEMP = 0.05
INV_TEMP = 1.0 / TEMP
EPS = 1e-8  # nn.CosineSimilarity default eps


def _cartesian_sim_kernel(c_ref, cht_ref, lblc_ref, lblr_ref, cnt_ref,
                          sim_ref, mlpp_ref, *, exp_dtype):
    # Operands are pre-normalized (unit rows / unit columns) in bf16, so the MXU
    # product IS the cosine, accumulated in f32.  No per-element norm scaling.
    cos = jnp.dot(c_ref[...], cht_ref[...],
                  preferred_element_type=jnp.float32)                 # (TM, N)
    sim_ref[...] = cos.astype(sim_ref.dtype)                          # bf16 writeback

    # |cos| <= 1 (+ tiny bf16 slack) -> a constant shift of INV_TEMP replaces the
    # per-row max reduction; log-softmax is shift-invariant so mlpp is unchanged.
    shifted = cos * INV_TEMP - INV_TEMP                               # (TM, N), <= ~0.2

    # exp on the EUP.  bf16 exp (v6e/v7x) roughly doubles EUP throughput; the
    # row-sum still accumulates in f32.
    exp_s = jnp.exp(shifted.astype(exp_dtype))
    log_sum = jnp.log(
        jnp.sum(exp_s.astype(jnp.float32), axis=1, keepdims=True))    # (TM, 1)

    # Positive (same-label) sum with a single select + row reduce; the per-row
    # positive COUNT is precomputed in the wrapper (includes the diagonal, so
    # it is always >= 1 and the divide below is NaN-safe).
    pos_sum = jnp.sum(
        jnp.where(lblc_ref[...] == lblr_ref[...], shifted, 0.0),
        axis=1, keepdims=True)                                        # (TM, 1)

    # mean_log_prob_pos = (sum_pos(shifted) - count * log_sum) / count
    mlpp_ref[...] = pos_sum / cnt_ref[...] - log_sum
    # NOTE: mlpp stays as a (TM, 1) block.  A lane-dense (1, TM) layout would
    # need tm % 128 == 0 (block/full-dim rule) and an in-kernel transpose for an
    # O(N) output — not worth the lowering risk next to the N^2 sim writeback.


def _vmem_capacity_bytes():
    """Per-core VMEM capacity (64 MiB/TC on v7x, 128 MiB on v5e/v6e)."""
    try:
        return int(pltpu.get_tpu_info().vmem_capacity_bytes)
    except Exception:
        return 64 * 1024 * 1024  # conservative fallback (v7x per-TC)


def _default_exp_dtype():
    """bf16 exp only where the EUP has a bf16 path (v6e/v7x); f32 otherwise."""
    try:
        kind = jax.devices()[0].device_kind.lower()
    except Exception:
        return jnp.float32
    if ("v6" in kind) or ("v7" in kind) or ("7x" in kind):
        return jnp.bfloat16
    return jnp.float32


def _pick_block_rows(n, d_pad, sim_itemsize, budget):
    """Largest row tile whose per-core VMEM footprint fits `budget`."""
    # Resident operands (grid-invariant blocks); Pallas still double-buffers
    # them by default, so count them twice.
    # TODO(synk): single-buffer ch^T / lbl_row (pipeline_mode=pl.Buffered(1) or a
    # one-shot VMEM scratch copy) to halve this resident term on v7x.
    resident = 2 * (d_pad * n * 2) + 2 * (n * 4)          # ch^T (bf16) + label row
    for tm in (1024, 512, 256, 128, 64, 32, 16, 8):       # multiples of 16 preferred
        if n % tm:
            continue
        stream_in = 2 * (tm * d_pad * 2 + 2 * tm * 4)     # c tile + lbl col + count
        stream_out = 2 * (tm * n * sim_itemsize + tm * 4) # sim tile + mlpp
        live = 3 * tm * n * 4                             # f32 intermediates
        if resident + stream_in + stream_out + live <= budget:
            return tm
    return 8 if n % 8 == 0 else n
    # TODO(synk): column-tiled (flash-style, online logsumexp) fallback so ch^T
    # need not be fully resident for very large N*D on v7x's 64 MiB VMEM.


def cartesian_similarity(c, ch, m_label, *, block_rows=None,
                         mxu_dtype=jnp.bfloat16, sim_dtype=jnp.bfloat16,
                         exp_dtype=None):
    """Pallas forward of Cartesian_similarity. Returns (sim*temp, loss, y_true)."""
    n, d = c.shape
    if exp_dtype is None:
        exp_dtype = _default_exp_dtype()

    # --- O(N*D) prep in the wrapper ------------------------------------------
    c32 = c.astype(jnp.float32)
    ch32 = ch.astype(jnp.float32)

    # Pre-normalize (fold 1/||.|| into the MXU operands).  NOTE: PyTorch clamps
    # the *product* of norms at eps; clamping each norm at sqrt(eps) is
    # equivalent for non-degenerate inputs.
    eps_n = math.sqrt(EPS)
    c_norm = c32 / jnp.maximum(
        jnp.sqrt(jnp.sum(c32 * c32, axis=-1, keepdims=True)), eps_n)
    ch_norm = ch32 / jnp.maximum(
        jnp.sqrt(jnp.sum(ch32 * ch32, axis=-1, keepdims=True)), eps_n)

    # Pad D to a multiple of 128 so the MXU K dimension is aligned (zero columns
    # of unit-norm rows do not change the dot product).
    d_pad = max(128, ((d + 127) // 128) * 128)
    if d_pad != d:
        pad = ((0, 0), (0, d_pad - d))
        c_norm = jnp.pad(c_norm, pad)
        ch_norm = jnp.pad(ch_norm, pad)

    c_mxu = c_norm.astype(mxu_dtype)                       # (N, d_pad)
    cht_mxu = ch_norm.T.astype(mxu_dtype)                  # (d_pad, N)

    # Labels / mask statistics.  The (N,N) compare is needed for y_true anyway;
    # its row-sum (positive count, >= 1 thanks to the diagonal) fuses with it.
    lbl = m_label.reshape(-1).astype(jnp.int32)
    lbl_col = lbl.reshape(n, 1)
    lbl_row = lbl.reshape(1, n)
    eq = lbl_col == lbl_row                                # (N, N) bool
    y_true = eq.astype(jnp.int8)                           # 1 B/elem, not int32
    pos_count = jnp.sum(eq, axis=1, keepdims=True).astype(jnp.float32)  # (N, 1)

    # --- tile selection / VMEM accounting -------------------------------------
    cap = _vmem_capacity_bytes()
    sim_itemsize = jnp.dtype(sim_dtype).itemsize
    tm = (_pick_block_rows(n, d_pad, sim_itemsize, budget=int(cap * 0.70))
          if block_rows is None else block_rows)
    assert n % tm == 0, f"block_rows={tm} must divide n={n}"
    grid = (n // tm,)
    vmem_limit = min(int(cap * 0.90), 127 * 1024 * 1024)

    itm = jnp.dtype(mxu_dtype).itemsize
    cost = pl.CostEstimate(
        flops=2 * n * n * d_pad + 6 * n * n,
        transcendentals=n * n + n,
        bytes_accessed=(2 * n * d_pad * itm        # c_norm, ch_norm^T
                        + 2 * n * 4                # labels (both views)
                        + n * 4                    # positive counts
                        + n * n * sim_itemsize     # cosine output (bf16)
                        + n * 4),                  # per-row mean_log_prob_pos
    )

    kernel = functools.partial(_cartesian_sim_kernel, exp_dtype=exp_dtype)

    sim, mlpp = pl.pallas_call(
        kernel,
        out_shape=(
            jax.ShapeDtypeStruct((n, n), sim_dtype),
            jax.ShapeDtypeStruct((n, 1), jnp.float32),
        ),
        grid_spec=pltpu.PrefetchScalarGridSpec(
            num_scalar_prefetch=0,
            grid=grid,
            in_specs=[
                pl.BlockSpec((tm, d_pad), lambda i: (i, 0)),  # normalized c rows
                pl.BlockSpec((d_pad, n), lambda i: (0, 0)),   # normalized ch^T, resident
                pl.BlockSpec((tm, 1), lambda i: (i, 0)),      # labels (column view)
                pl.BlockSpec((1, n), lambda i: (0, 0)),       # labels (row view), resident
                pl.BlockSpec((tm, 1), lambda i: (i, 0)),      # per-row positive counts
            ],
            out_specs=(
                pl.BlockSpec((tm, n), lambda i: (i, 0)),      # cosine tile (lane-dense)
                pl.BlockSpec((tm, 1), lambda i: (i, 0)),      # per-row mean_log_prob_pos
            ),
        ),
        compiler_params=pltpu.CompilerParams(
            dimension_semantics=("parallel",),                # megacore-shardable rows
            vmem_limit_bytes=vmem_limit,
        ),
        cost_estimate=cost,
    )(c_mxu, cht_mxu, lbl_col, lbl_row, pos_count)

    loss = -jnp.mean(mlpp)                                   # divide by GLOBAL n
    return sim, loss, y_true
    # TODO(synk): m_label=None path (loss=0, y_true=0) would skip the mask/loss
    # outputs entirely; this wrapper always expects labels.


def _reference(c, ch, m_label, temp=TEMP, eps=EPS):
    dots = c @ ch.T
    cn = jnp.sqrt(jnp.sum(c * c, axis=-1, keepdims=True))
    chn = jnp.sqrt(jnp.sum(ch * ch, axis=-1, keepdims=True))
    cos = dots / jnp.maximum(cn * chn.T, eps)
    sim = cos / temp
    mask = (m_label[:, None] == m_label[None, :]).astype(jnp.float32)
    logits = sim - jnp.max(sim, axis=1, keepdims=True)
    log_prob = logits - jnp.log(jnp.sum(jnp.exp(logits), axis=1, keepdims=True))
    mlpp = jnp.sum(mask * log_prob, axis=1) / jnp.sum(mask, axis=1)
    loss = -jnp.mean(mlpp)
    return sim * temp, loss, mask.astype(jnp.int32)


if __name__ == "__main__":
    N, D = 32, 32
    key = jax.random.PRNGKey(0)
    kc, kh, kl = jax.random.split(key, 3)
    c = jax.random.normal(kc, (N, D), dtype=jnp.float32)
    ch = jax.random.normal(kh, (N, D), dtype=jnp.float32)
    m_label = jax.random.randint(kl, (N,), 0, 3, dtype=jnp.int32)

    # block_rows=16 -> grid of 2 row tiles (exercises the pipelined path) with
    # bf16-sublane-aligned (16, N) output blocks.
    sim, loss, y_true = cartesian_similarity(c, ch, m_label, block_rows=16)
    jax.block_until_ready((sim, loss, y_true))

    sim_ref, loss_ref, y_true_ref = _reference(c, ch, m_label)

    # bf16 MXU feed + bf16 sim writeback perturbs cosines slightly -> relaxed tol.
    assert jnp.allclose(sim.astype(jnp.float32), sim_ref, rtol=2e-2, atol=2e-2), "sim mismatch"
    assert jnp.allclose(loss, loss_ref, rtol=5e-2, atol=5e-2), "loss mismatch"
    assert jnp.array_equal(y_true.astype(jnp.int32), y_true_ref), "y_true mismatch"

    print("KERNEL_OK")
</pallas_src>

<mosaic_0001>
module attributes {stable_mosaic.version = 11 : i64} {
  func.func @_cartesian_sim_kernel(%arg0: i32, %arg1: memref<16x128xbf16, #tpu.memory_space<vmem>>, %arg2: memref<128x32xbf16, #tpu.memory_space<vmem>>, %arg3: memref<16x1xi32, #tpu.memory_space<vmem>>, %arg4: memref<1x32xi32, #tpu.memory_space<vmem>>, %arg5: memref<16x1xf32, #tpu.memory_space<vmem>>, %arg6: memref<16x32xbf16, #tpu.memory_space<vmem>>, %arg7: memref<16x1xf32, #tpu.memory_space<vmem>>) attributes {dimension_semantics = [#tpu.dimension_semantics<parallel>], iteration_bounds = array<i64: 2>, scalar_prefetch = 0 : i64, scratch_operands = 0 : i64, tpu.core_type = #tpu.core_type<tc>, window_params = [{transform_indices = @transform_0, window_bounds = array<i64: 16, 128>}, {pipeline_mode = #tpu.pipeline_mode<synchronous>, transform_indices = @transform_1, window_bounds = array<i64: 128, 32>}, {transform_indices = @transform_2, window_bounds = array<i64: 16, 1>}, {pipeline_mode = #tpu.pipeline_mode<synchronous>, transform_indices = @transform_3, window_bounds = array<i64: 1, 32>}, {transform_indices = @transform_4, window_bounds = array<i64: 16, 1>}, {transform_indices = @transform_5, window_bounds = array<i64: 16, 32>}, {transform_indices = @transform_6, window_bounds = array<i64: 16, 1>}]} {
    %c0 = arith.constant 0 : index
    %c0_0 = arith.constant 0 : index
    %0 = vector.load %arg1[%c0, %c0_0] : memref<16x128xbf16, #tpu.memory_space<vmem>>, vector<16x128xbf16>
    %c0_1 = arith.constant 0 : index
    %c0_2 = arith.constant 0 : index
    %1 = vector.load %arg2[%c0_1, %c0_2] : memref<128x32xbf16, #tpu.memory_space<vmem>>, vector<128x32xbf16>
    %cst = arith.constant dense<0.000000e+00> : vector<16x32xf32>
    %2 = tpu.matmul %0, %1, %cst {dimension_numbers = #tpu.dot_dimension_numbers<[1], [0], [0], [1], [0, 0, 1, 1], [], []>} : vector<16x128xbf16>, vector<128x32xbf16>, vector<16x32xf32> -> vector<16x32xf32>
    %3 = arith.truncf %2 : vector<16x32xf32> to vector<16x32xbf16>
    %c0_3 = arith.constant 0 : index
    %c0_4 = arith.constant 0 : index
    %4 = vector.load %arg6[%c0_3, %c0_4] : memref<16x32xbf16, #tpu.memory_space<vmem>>, vector<16x32xbf16>
    tpu.vector_store %arg6[%c0_3, %c0_4], %3 {strides = array<i32>} : memref<16x32xbf16, #tpu.memory_space<vmem>>, vector<16x32xbf16>,
    %cst_5 = arith.constant 2.000000e+01 : f32
    %5 = vector.broadcast %cst_5 : f32 to vector<16x32xf32>
    %6 = arith.mulf %2, %5 : vector<16x32xf32>
    %cst_6 = arith.constant 2.000000e+01 : f32
    %7 = vector.broadcast %cst_6 : f32 to vector<16x32xf32>
    %8 = arith.subf %6, %7 : vector<16x32xf32>
    %9 = math.exp %8 : vector<16x32xf32>
    %cst_7 = arith.constant dense<0.000000e+00> : vector<16xf32>
    %10 = vector.multi_reduction <add>, %9, %cst_7 [1] : vector<16x32xf32> to vector<16xf32>
    %11 = vector.shape_cast %10 : vector<16xf32> to vector<16x1xf32>
    %12 = math.log %11 : vector<16x1xf32>
    %c0_8 = arith.constant 0 : index
    %c0_9 = arith.constant 0 : index
    %13 = vector.load %arg3[%c0_8, %c0_9] : memref<16x1xi32, #tpu.memory_space<vmem>>, vector<16x1xi32>
    %c0_10 = arith.constant 0 : index
    %c0_11 = arith.constant 0 : index
    %14 = vector.load %arg4[%c0_10, %c0_11] : memref<1x32xi32, #tpu.memory_space<vmem>>, vector<1x32xi32>
    %15 = vector.broadcast %13 : vector<16x1xi32> to vector<16x32xi32>
    %16 = vector.broadcast %14 : vector<1x32xi32> to vector<16x32xi32>
    %17 = arith.cmpi eq, %15, %16 : vector<16x32xi32>
    %cst_12 = arith.constant 0.000000e+00 : f32
    %18 = vector.broadcast %cst_12 : f32 to vector<16x32xf32>
    %19 = arith.select %17, %8, %18 : vector<16x32xi1>, vector<16x32xf32>
    %cst_13 = arith.constant dense<0.000000e+00> : vector<16xf32>
    %20 = vector.multi_reduction <add>, %19, %cst_13 [1] : vector<16x32xf32> to vector<16xf32>
    %21 = vector.shape_cast %20 : vector<16xf32> to vector<16x1xf32>
    %c0_14 = arith.constant 0 : index
    %c0_15 = arith.constant 0 : index
    %22 = vector.load %arg5[%c0_14, %c0_15] : memref<16x1xf32, #tpu.memory_space<vmem>>, vector<16x1xf32>
    %23 = arith.divf %21, %22 : vector<16x1xf32>
    %24 = arith.subf %23, %12 : vector<16x1xf32>
    %c0_16 = arith.constant 0 : index
    %c0_17 = arith.constant 0 : index
    %25 = vector.load %arg7[%c0_16, %c0_17] : memref<16x1xf32, #tpu.memory_space<vmem>>, vector<16x1xf32>
    tpu.vector_store %arg7[%c0_16, %c0_17], %24 {strides = array<i32>} : memref<16x1xf32, #tpu.memory_space<vmem>>, vector<16x1xf32>,
    return
  }
  func.func @transform_0(%arg0: i32) -> (i32, i32) {
    %c0_i32 = arith.constant 0 : i32
    %c0_i32_0 = arith.constant 0 : i32
    return %arg0, %c0_i32 : i32, i32
  }
  func.func @transform_1(%arg0: i32) -> (i32, i32) {
    %c0_i32 = arith.constant 0 : i32
    %c0_i32_0 = arith.constant 0 : i32
    %c0_i32_1 = arith.constant 0 : i32
    return %c0_i32, %c0_i32_0 : i32, i32
  }
  func.func @transform_2(%arg0: i32) -> (i32, i32) {
    %c0_i32 = arith.constant 0 : i32
    %c0_i32_0 = arith.constant 0 : i32
    return %arg0, %c0_i32 : i32, i32
  }
  func.func @transform_3(%arg0: i32) -> (i32, i32) {
    %c0_i32 = arith.constant 0 : i32
    %c0_i32_0 = arith.constant 0 : i32
    %c0_i32_1 = arith.constant 0 : i32
    return %c0_i32, %c0_i32_0 : i32, i32
  }
  func.func @transform_4(%arg0: i32) -> (i32, i32) {
    %c0_i32 = arith.constant 0 : i32
    %c0_i32_0 = arith.constant 0 : i32
    return %arg0, %c0_i32 : i32, i32
  }
  func.func @transform_5(%arg0: i32) -> (i32, i32) {
    %c0_i32 = arith.constant 0 : i32
    %c0_i32_0 = arith.constant 0 : i32
    return %arg0, %c0_i32 : i32, i32
  }
  func.func @transform_6(%arg0: i32) -> (i32, i32) {
    %c0_i32 = arith.constant 0 : i32
    %c0_i32_0 = arith.constant 0 : i32
    return %arg0, %c0_i32 : i32, i32
  }
}

</mosaic_0001>

<llo_original>
// kernel: tpu_custom_call.1
$region0: #{tpu_custom_call.1}
  #allocation0 [shape = 'u32[]', space=smem, size = 0x4, offset = 0x4, fixed_abs, tag = 'smem constant byte address 0x4 - core index']
  #allocation1 [shape = 'u32[144,128]{1,0:T(1,128)}', space=vmem, size = 0x12000, scoped, tag = 'internal scratch']
  %s0 = inlined_call_operand.vmem [shape: bf16[32,128], index: 0, kind: input, shape index: {}]
  %s1 = inlined_call_operand.vmem [shape: bf16[128,32], index: 1, kind: input, shape index: {}]
  %s2 = inlined_call_operand.vmem [shape: s32[32,1], index: 2, kind: input, shape index: {}]
  %s3 = inlined_call_operand.vmem [shape: s32[1,32], index: 3, kind: input, shape index: {}]
  %s4 = inlined_call_operand.vmem [shape: f32[32,1], index: 4, kind: input, shape index: {}]
  %s5 = inlined_call_operand.hbm [shape: bf16[32,32], index: 5, kind: output, shape index: {0}]
  %s6 = inlined_call_operand.vmem [shape: f32[32,1], index: 6, kind: output, shape index: {1}]
  %7 = xla_tuple %s5, %s6
  %s8 = sld [smem:[#allocation0]]
  $region61: #{tpu_custom_call.1} parent=0
    _
  %s10 = ssub.s32 1, %s8
  %s11 = scalar_select 0, %s10, %s8
  $region1: #{tpu_custom_call.1} parent=0
    #allocation2 [shape = 'u8[8192]{0}', space=vmem, size = 0x2000, scoped, tag = 'output window, operand 0']
    #allocation3 [shape = 's32[2]{0}', space=sflag, size = 0x8, scoped, tag = 'scoped memory for tpu_custom_call.1']
    %12 = vsyncpa [#allocation3], 0
    %s13 = scalar_lea.sflag [#allocation3], 1
    %14 = vsyncpa %s13, 0
    loop: start=0, step=1, limit=4
    $region2: #{tpu_custom_call.1} parent=1 // loop_pre_header
      _
    $region3: #{tpu_custom_call.1} parent=1 // loop_header
      %s16 = sphi 0, %s20
      %p17 = scmp.ge.s32.totalorder %s16, 4
      %s26 = sphi 0, %s28
      %s29 = sphi 0, %s26
      %s30 = sphi 0, %s29
      %s46 = sphi 0, %s30
      %s50 = sphi 0, %s50
      %s52 = sphi 0, %s50
      %s53 = sphi 0, %s52
      %s67 = sphi 0, %s53
      %s73 = sphi 0, %s75
      %s76 = sphi 0, %s73
      %s77 = sphi 0, %s76
      %s93 = sphi 0, %s77
      %s97 = sphi 0, %s97
      %s99 = sphi 0, %s97
      %s100 = sphi 0, %s99
      %s114 = sphi 0, %s100
      %s120 = sphi 0, %s122
      %s123 = sphi 0, %s120
      %s124 = sphi 0, %s123
      %s140 = sphi 0, %s124
      %s146 = sphi 0, %s148
      %s149 = sphi 0, %s146
      %s150 = sphi 0, %s149
      %s166 = sphi 0, %s150
      %s172 = sphi 0, %s174
      %s175 = sphi 0, %s172
      %s176 = sphi 0, %s175
      %s192 = sphi 0, %s176
    $region4: #{tpu_custom_call.1} parent=1 // loop_header_branch
      %19 = sbr.rel (%p17) target = $region8
    $region5: #{tpu_custom_call.1} parent=1 // loop_body
      %s21 = ssub.s32 %s16, 1
      %s22 = ssub.s32 %s16, 2
      %s23 = sadd.s32 %s16, 1
      %s24 = ssub.s32 %s16, %s23
      %p25 = scmp.eq.s32.totalorder %s24, 0
      %s27 = sadd.s32 %s26, 1
      %s28 = scalar_select %p25, %s26, %s27
      %p31 = pneg %p25
      %p32 = scmp.eq.s32.totalorder %s16, 1
      %p33 = por %p31, %p32
      %p34 = scmp.ne.s32.totalorder %s26, %s29
      %p35 = scmp.eq.s32.totalorder %s16, 0
      %p36 = por %p34, %p35
      %p37 = scmp.ne.s32.totalorder %s26, %s29
      %p38 = scmp.eq.s32.totalorder %s21, 1
      %p39 = por %p37, %p38
      %p40 = scmp.ne.s32.totalorder %s29, %s30
      %p41 = scmp.eq.s32.totalorder %s21, 0
      %p42 = por %p40, %p41
      %p43 = scmp.ne.s32.totalorder %s29, %s30
      %p44 = scmp.eq.s32.totalorder %s22, 1
      %p45 = por %p43, %p44
      %p47 = scmp.ne.s32.totalorder %s30, %s46
      %p48 = scmp.eq.s32.totalorder %s22, 0
      %p49 = por %p47, %p48
      %s51 = sadd.s32 %s50, 1
      %p54 = scmp.eq.s32.totalorder %s16, 1
      %p55 = scmp.ne.s32.totalorder %s50, %s52
      %p56 = scmp.eq.s32.totalorder %s16, 0
      %p57 = por %p55, %p56
      %p58 = scmp.ne.s32.totalorder %s50, %s52
      %p59 = scmp.eq.s32.totalorder %s21, 1
      %p60 = por %p58, %p59
      %p61 = scmp.ne.s32.totalorder %s52, %s53
      %p62 = scmp.eq.s32.totalorder %s21, 0
      %p63 = por %p61, %p62
      %p64 = scmp.ne.s32.totalorder %s52, %s53
      %p65 = scmp.eq.s32.totalorder %s22, 1
      %p66 = por %p64, %p65
      %p68 = scmp.ne.s32.totalorder %s53, %s67
      %p69 = scmp.eq.s32.totalorder %s22, 0
      %p70 = por %p68, %p69
      %s71 = ssub.s32 %s16, %s23
      %p72 = scmp.eq.s32.totalorder %s71, 0
      %s74 = sadd.s32 %s73, 1
      %s75 = scalar_select %p72, %s73, %s74
      %p78 = pneg %p72
      %p79 = scmp.eq.s32.totalorder %s16, 1
      %p80 = por %p78, %p79
      %p81 = scmp.ne.s32.totalorder %s73, %s76
      %p82 = scmp.eq.s32.totalorder %s16, 0
      %p83 = por %p81, %p82
      %p84 = scmp.ne.s32.totalorder %s73, %s76
      %p85 = scmp.eq.s32.totalorder %s21, 1
      %p86 = por %p84, %p85
      %p87 = scmp.ne.s32.totalorder %s76, %s77
      %p88 = scmp.eq.s32.totalorder %s21, 0
      %p89 = por %p87, %p88
      %p90 = scmp.ne.s32.totalorder %s76, %s77
      %p91 = scmp.eq.s32.totalorder %s22, 1
      %p92 = por %p90, %p91
      %p94 = scmp.ne.s32.totalorder %s77, %s93
      %p95 = scmp.eq.s32.totalorder %s22, 0
      %p96 = por %p94, %p95
      %s98 = sadd.s32 %s97, 1
      %p101 = scmp.eq.s32.totalorder %s16, 1
      %p102 = scmp.ne.s32.totalorder %s97, %s99
      %p103 = scmp.eq.s32.totalorder %s16, 0
      %p104 = por %p102, %p103
      %p105 = scmp.ne.s32.totalorder %s97, %s99
      %p106 = scmp.eq.s32.totalorder %s21, 1
      %p107 = por %p105, %p106
      %p108 = scmp.ne.s32.totalorder %s99, %s100
      %p109 = scmp.eq.s32.totalorder %s21, 0
      %p110 = por %p108, %p109
      %p111 = scmp.ne.s32.totalorder %s99, %s100
      %p112 = scmp.eq.s32.totalorder %s22, 1
      %p113 = por %p111, %p112
      %p115 = scmp.ne.s32.totalorder %s100, %s114
      %p116 = scmp.eq.s32.totalorder %s22, 0
      %p117 = por %p115, %p116
      %s118 = ssub.s32 %s16, %s23
      %p119 = scmp.eq.s32.totalorder %s118, 0
      %s121 = sadd.s32 %s120, 1
      %s122 = scalar_select %p119, %s120, %s121
      %p125 = pneg %p119
      %p126 = scmp.eq.s32.totalorder %s16, 1
      %p127 = por %p125, %p126
      %p128 = scmp.ne.s32.totalorder %s120, %s123
      %p129 = scmp.eq.s32.totalorder %s16, 0
      %p130 = por %p128, %p129
      %p131 = scmp.ne.s32.totalorder %s120, %s123
      %p132 = scmp.eq.s32.totalorder %s21, 1
      %p133 = por %p131, %p132
      %p134 = scmp.ne.s32.totalorder %s123, %s124
      %p135 = scmp.eq.s32.totalorder %s21, 0
      %p136 = por %p134, %p135
      %p137 = scmp.ne.s32.totalorder %s123, %s124
      %p138 = scmp.eq.s32.totalorder %s22, 1
      %p139 = por %p137, %p138
      %p141 = scmp.ne.s32.totalorder %s124, %s140
      %p142 = scmp.eq.s32.totalorder %s22, 0
      %p143 = por %p141, %p142
      %s144 = ssub.s32 %s16, %s23
      %p145 = scmp.eq.s32.totalorder %s144, 0
      %s147 = sadd.s32 %s146, 1
      %s148 = scalar_select %p145, %s146, %s147
      %p151 = pneg %p145
      %p152 = scmp.eq.s32.totalorder %s16, 1
      %p153 = por %p151, %p152
      %p154 = scmp.ne.s32.totalorder %s146, %s149
      %p155 = scmp.eq.s32.totalorder %s16, 0
      %p156 = por %p154, %p155
      %p157 = scmp.ne.s32.totalorder %s146, %s149
      %p158 = scmp.eq.s32.totalorder %s21, 1
      %p159 = por %p157, %p158
      %p160 = scmp.ne.s32.totalorder %s149, %s150
      %p161 = scmp.eq.s32.totalorder %s21, 0
      %p162 = por %p160, %p161
      %p163 = scmp.ne.s32.totalorder %s149, %s150
      %p164 = scmp.eq.s32.totalorder %s22, 1
      %p165 = por %p163, %p164
      %p167 = scmp.ne.s32.totalorder %s150, %s166
      %p168 = scmp.eq.s32.totalorder %s22, 0
      %p169 = por %p167, %p168
      %s170 = ssub.s32 %s16, %s23
      %p171 = scmp.eq.s32.totalorder %s170, 0
      %s173 = sadd.s32 %s172, 1
      %s174 = scalar_select %p171, %s172, %s173
      %p177 = pneg %p171
      %p178 = scmp.eq.s32.totalorder %s16, 1
      %p179 = por %p177, %p178
      %p180 = scmp.ne.s32.totalorder %s172, %s175
      %p181 = scmp.eq.s32.totalorder %s16, 0
      %p182 = por %p180, %p181
      %p183 = scmp.ne.s32.totalorder %s172, %s175
      %p184 = scmp.eq.s32.totalorder %s21, 1
      %p185 = por %p183, %p184
      %p186 = scmp.ne.s32.totalorder %s175, %s176
      %p187 = scmp.eq.s32.totalorder %s21, 0
      %p188 = por %p186, %p187
      %p189 = scmp.ne.s32.totalorder %s175, %s176
      %p190 = scmp.eq.s32.totalorder %s22, 1
      %p191 = por %p189, %p190
      %p193 = scmp.ne.s32.totalorder %s176, %s192
      %p194 = scmp.eq.s32.totalorder %s22, 0
      %p195 = por %p193, %p194
      %p196 = scmp.le.s32.totalorder 1, %s16
      %p197 = scmp.lt.s32.totalorder %s16, 3
      %p198 = pnand %p196, %p197
      %p199 = pneg %p198
      // Predicated region
      $region9: #{tpu_custom_call.1} parent=5 // pred_check
        _
      $region10: #{tpu_custom_call.1} parent=5 // pred_check_branch
        %201 = sbr.rel (%p198) target = $region12
      $region11: #{tpu_custom_call.1} parent=5 // pred_region
        %s202 = ssub.s32 %s16, 1
        // Predicated region
        $region13: #{tpu_custom_call.1} parent=11 // pred_check
          %p203 = pneg %p63
        $region14: #{tpu_custom_call.1} parent=11 // pred_check_branch
          %205 = sbr.rel (%p203) target = $region16
        $region15: #{tpu_custom_call.1} parent=11 // pred_region
          _
        $region16: #{tpu_custom_call.1} parent=11 // pred_fallthru
          _
        // Predicated region
        $region17: #{tpu_custom_call.1} parent=11 // pred_check
          %p206 = pneg %p110
        $region18: #{tpu_custom_call.1} parent=11 // pred_check_branch
          %208 = sbr.rel (%p206) target = $region20
        $region19: #{tpu_custom_call.1} parent=11 // pred_region
          _
        $region20: #{tpu_custom_call.1} parent=11 // pred_fallthru
          _
      $region12: #{tpu_custom_call.1} parent=5 // pred_fallthru
        _
      %p209 = scmp.lt.s32.totalorder %s16, 2
      // Predicated region
      $region21: #{tpu_custom_call.1} parent=5 // pred_check
        %p210 = pneg %p209
      $region22: #{tpu_custom_call.1} parent=5 // pred_check_branch
        %212 = sbr.rel (%p210) target = $region24
      $region23: #{tpu_custom_call.1} parent=5 // pred_region
        // Predicated region
        $region25: #{tpu_custom_call.1} parent=23 // pred_check
          %p213 = pneg %p36
        $region26: #{tpu_custom_call.1} parent=23 // pred_check_branch
          %215 = sbr.rel (%p213) target = $region28
        $region27: #{tpu_custom_call.1} parent=23 // pred_region
          %s216 = smul.u32 2, %s16
          %p217 = scmp.lt.s32.totalorder %s216, 3
          %s218 = scalar_select %p217, %s216, 3
          %s219 = smul.addr %s218, 4
          %s220 = scalar_lea.vmem %s0, %s219
          %s221 = smul.u32 2, %s16
        $region28: #{tpu_custom_call.1} parent=23 // pred_fallthru
          _
        // Predicated region
        $region29: #{tpu_custom_call.1} parent=23 // pred_check
          %p222 = pneg %p83
        $region30: #{tpu_custom_call.1} parent=23 // pred_check_branch
          %224 = sbr.rel (%p222) target = $region32
        $region31: #{tpu_custom_call.1} parent=23 // pred_region
          %s225 = smul.u32 2, %s16
          %p226 = scmp.lt.s32.totalorder %s225, 3
          %s227 = scalar_select %p226, %s225, 3
          %s228 = smul.addr %s227, 8
          %s229 = scalar_lea.vmem %s2, %s228
          %s230 = smul.u32 2, %s16
        $region32: #{tpu_custom_call.1} parent=23 // pred_fallthru
          _
        // Predicated region
        $region33: #{tpu_custom_call.1} parent=23 // pred_check
          %p231 = pneg %p130
        $region34: #{tpu_custom_call.1} parent=23 // pred_check_branch
          %233 = sbr.rel (%p231) target = $region36
        $region35: #{tpu_custom_call.1} parent=23 // pred_region
          %s234 = smul.u32 2, %s16
          %p235 = scmp.lt.s32.totalorder %s234, 3
          %s236 = scalar_select %p235, %s234, 3
          %s237 = smul.addr %s236, 8
          %s238 = scalar_lea.vmem %s4, %s237
          %s239 = smul.u32 2, %s16
        $region36: #{tpu_custom_call.1} parent=23 // pred_fallthru
          _
      $region24: #{tpu_custom_call.1} parent=5 // pred_fallthru
        _
      %p240 = scmp.le.s32.totalorder 1, %s16
      %p241 = scmp.lt.s32.totalorder %s16, 3
      %p242 = pnand %p240, %p241
      %p243 = pneg %p242
      // Predicated region
      $region37: #{tpu_custom_call.1} parent=5 // pred_check
        _
      $region38: #{tpu_custom_call.1} parent=5 // pred_check_branch
        %245 = sbr.rel (%p242) target = $region40
      $region39: #{tpu_custom_call.1} parent=5 // pred_region
        %s246 = ssub.s32 %s16, 1
        %s247 = smul.u32 2, %s21
        %p248 = scmp.lt.s32.totalorder %s247, 3
        %s249 = scalar_select %p248, %s247, 3
        %s250 = smul.addr %s249, 4
        %s251 = scalar_lea.vmem %s0, %s250
        %p252 = pneg %p42
        %p253 = pneg %p39
        %p254 = pneg %p63
        %p255 = pneg %p60
        %s256 = smul.u32 2, %s21
        %p257 = scmp.lt.s32.totalorder %s256, 3
        %s258 = scalar_select %p257, %s256, 3
        %s259 = smul.addr %s258, 8
        %s260 = scalar_lea.vmem %s2, %s259
        %p261 = pneg %p89
        %p262 = pneg %p86
        %p263 = pneg %p110
        %p264 = pneg %p107
        %s265 = smul.u32 2, %s21
        %p266 = scmp.lt.s32.totalorder %s265, 3
        %s267 = scalar_select %p266, %s265, 3
        %s268 = smul.addr %s267, 8
        %s269 = scalar_lea.vmem %s4, %s268
        %p270 = pneg %p136
        %p271 = pneg %p133
        %p272 = pneg %p162
        %p273 = pneg %p159
        %s274 = sand.u32 %s149, 1
        %s275 = scalar_lea.sflag [#allocation3], %s274
        %s276 = sand.u32 %s149, 1
        %s277 = smul.addr %s276, 8
        %s278 = scalar_lea.vmem [#allocation2], %s277
        %p279 = pneg %p188
        %p280 = pneg %p185
        %s281 = smul.u32 2, %s21
        %p282 = scmp.lt.s32.totalorder %s281, 3
        %s283 = scalar_select %p282, %s281, 3
        %s284 = smul.addr %s283, 8
        %s285 = scalar_lea.vmem %s6, %s284
        %s286 = smul.u32 2, %s21
        %p287 = scmp.lt.s32.totalorder %s286, 3
        %s288 = scalar_select %p287, %s286, 3
        %s289 = smul.addr %s288, 4
        %s290 = scalar_lea.vmem %s0, %s289
        %s291 = smul.u32 2, %s21
        %s292 = smul.u32 2, %s21
        %p293 = scmp.lt.s32.totalorder %s292, 3
        %s294 = scalar_select %p293, %s292, 3
        %s295 = smul.addr %s294, 8
        %s296 = scalar_lea.vmem %s2, %s295
        %s297 = smul.u32 2, %s21
        %s298 = smul.u32 2, %s21
        %p299 = scmp.lt.s32.totalorder %s298, 3
        %s300 = scalar_select %p299, %s298, 3
        %s301 = smul.addr %s300, 8
        %s302 = scalar_lea.vmem %s4, %s301
        %s303 = smul.u32 2, %s21
        %s304 = smul.u32 2, %s21
        %s305 = smul.u32 2, %s21
        %p306 = scmp.lt.s32.totalorder %s305, 3
        %s307 = scalar_select %p306, %s305, 3
        %s308 = smul.addr %s307, 8
        %s309 = scalar_lea.vmem %s6, %s308
        %s310 = smul.u32 2, %s21
        %v312 = vld [vmem:[%s290] sm:$0xf]
        %v313 = vld [vmem:[%s290 + $0x4] sm:$0xf]
        %v314 = vld [vmem:[%s1] sm:$0xf]
        %v315 = vld [vmem:[%s1 + $0x4] sm:$0xf]
        %v316 = vld [vmem:[%s1 + $0x8] sm:$0xf]
        %v317 = vld [vmem:[%s1 + $0xc] sm:$0xf]
        %v318 = vld [vmem:[%s1 + $0x10] sm:$0xf]
        %v319 = vld [vmem:[%s1 + $0x14] sm:$0xf]
        %v320 = vld [vmem:[%s1 + $0x18] sm:$0xf]
        %v321 = vld [vmem:[%s1 + $0x1c] sm:$0xf]
        %v322 = vld [vmem:[%s1 + $0x20] sm:$0xf]
        %v323 = vld [vmem:[%s1 + $0x24] sm:$0xf]
        %v324 = vld [vmem:[%s1 + $0x28] sm:$0xf]
        %v325 = vld [vmem:[%s1 + $0x2c] sm:$0xf]
        %v326 = vld [vmem:[%s1 + $0x30] sm:$0xf]
        %v327 = vld [vmem:[%s1 + $0x34] sm:$0xf]
        %v328 = vld [vmem:[%s1 + $0x38] sm:$0xf]
        %v329 = vld [vmem:[%s1 + $0x3c] sm:$0xf]
        %v332 = vunpack.c.l.b16 %v312
        %v333 = vunpack.c.l.b16 %v313
        %v334 = vpack.c.b16 %v333, %v332
        %v352 = vunpack.c.l.b16 %v314
        %v353 = vunpack.c.l.b16 %v315
        %v354 = vunpack.c.l.b16 %v316
        %v355 = vunpack.c.l.b16 %v317
        %v356 = vunpack.c.l.b16 %v318
        %v357 = vunpack.c.l.b16 %v319
        %v358 = vunpack.c.l.b16 %v320
        %v359 = vunpack.c.l.b16 %v321
        %v360 = vunpack.c.l.b16 %v322
        %v361 = vunpack.c.l.b16 %v323
        %v362 = vunpack.c.l.b16 %v324
        %v363 = vunpack.c.l.b16 %v325
        %v364 = vunpack.c.l.b16 %v326
        %v365 = vunpack.c.l.b16 %v327
        %v366 = vunpack.c.l.b16 %v328
        %v367 = vunpack.c.l.b16 %v329
        %v368 = vpack.c.b16 %v353, %v352
        %v369 = vpack.c.b16 %v355, %v354
        %v370 = vpack.c.b16 %v357, %v356
        %v371 = vpack.c.b16 %v359, %v358
        %v372 = vpack.c.b16 %v361, %v360
        %v373 = vpack.c.b16 %v363, %v362
        %v374 = vpack.c.b16 %v365, %v364
        %v375 = vpack.c.b16 %v367, %v366
        %384 = vmatprep.subr.bf16.mxu0 0
        %385 = vmatpush1.bf16.msra.mxu0 %v368
        %386 = vmatprep.subr.bf16.mxu0 0
        %387 = vmatpush1.bf16.msra.mxu0 %v369
        %388 = vmatprep.subr.bf16.mxu0 0
        %389 = vmatpush1.bf16.msra.mxu0 %v370
        %390 = vmatprep.subr.bf16.mxu0 0
        %391 = vmatpush1.bf16.msra.mxu0 %v371
        %392 = vmatprep.subr.bf16.mxu0 0
        %393 = vmatpush1.bf16.msra.mxu0 %v372
        %394 = vmatprep.subr.bf16.mxu0 0
        %395 = vmatpush1.bf16.msra.mxu0 %v373
        %396 = vmatprep.subr.bf16.mxu0 0
        %397 = vmatpush1.bf16.msra.mxu0 %v374
        %398 = vmatprep.subr.bf16.mxu0 0
        %399 = vmatpush1.bf16.msra.mxu0 %v375
        %400 = vmatprep.subr.bf16.mxu0 0
        %401 = vmatpush1.bf16.msra.mxu0 0
        %402 = vmatprep.subr.bf16.mxu0 0
        %403 = vmatpush1.bf16.msra.mxu0 0
        %404 = vmatprep.subr.bf16.mxu0 0
        %405 = vmatpush1.bf16.msra.mxu0 0
        %406 = vmatprep.subr.bf16.mxu0 0
        %407 = vmatpush1.bf16.msra.mxu0 0
        %408 = vmatprep.subr.bf16.mxu0 0
        %409 = vmatpush1.bf16.msra.mxu0 0
        %410 = vmatprep.subr.bf16.mxu0 0
        %411 = vmatpush1.bf16.msra.mxu0 0
        %412 = vmatprep.subr.bf16.mxu0 0
        %413 = vmatpush1.bf16.msra.mxu0 0
        %414 = vmatprep.subr.bf16.mxu0 0
        %415 = vmatpush1.bf16.msra.mxu0 0
        %416 = vmatprep.mubr.bf16.mxu0 0
        %417 = vmatmul.mubr.bf16.gmra.mrb[0].mxu0 %v334
        %v418 = vpop.f32.mrb[0].mxu0
        %v419 = vadd.f32 0.0, %v418
        %v420 = vpop.f32.mrb[0].mxu0
        %v421 = vpop.f32.mrb[0].mxu0
        %v422 = vadd.f32 0.0, %v421
        %v423 = vpop.f32.mrb[0].mxu0
        %424 = vdwg.mxu0
        %v425 = vpack.c.bf16 %v422, %v419
        %v427 = vunpack.c.l.b16 %v425
        %v428 = vunpack.c.h.b16 %v425
        %v429 = vpack.c.b16 %v427, %v427
        %v430 = vpack.c.b16 %v428, %v428
        %vm433 = vcmask 257024
        %434 = vst.msk [vmem:[%s278] sm:$0xf] %vm433, %v429
        %435 = vst.msk [vmem:[%s278 + $0x4] sm:$0xf] %vm433, %v430
        %v436 = vmul.f32 %v419, 20.0
        %v437 = vmul.f32 %v422, 20.0
        %v438 = vsub.f32 %v436, 20.0
        %v439 = vsub.f32 %v437, 20.0
        %v440 = vmul.f32 %v438, 1.442695
        %v441 = vpow.pop %v440
        %v442 = vmul.f32 %v439, 1.442695
        %v443 = vpow.pop %v442
        %vm444 = vcmask 261120
        %v445 = vsel %vm444, %v441, 0.0
        %446 = vadd.xlane.f32.xlu0 %v445
        %v447 = vpop.xlane.xlu0 %446
        %v448 = vsel %vm444, %v443, 0.0
        %449 = vadd.xlane.f32.xlu0 %v448
        %v450 = vpop.xlane.xlu0 %449
        %v451 = vlog2.pop %v447
        %v452 = vmul.f32 %v451, 0.6931472
        %v453 = vlog2.pop %v450
        %v454 = vmul.f32 %v453, 0.6931472
        %v455 = vld [vmem:[%s296] sm:$0xff]
        %v456 = vld [vmem:[%s296 + $0x8] sm:$0xff]
        %v457 = vld [vmem:[%s3] sm:$0x1]
        %458 = vset.pattern.permute.xlu0 0
        %459 = vperm.xlu0 %458, %v455
        %v460 = vpop.permute.xlu0 %459
        %461 = vset.pattern.permute.xlu0 0
        %462 = vperm.xlu0 %461, %v456
        %v463 = vpop.permute.xlu0 %462
        %v464 = vlaneseq
        %v465 = vshrl.u32 %v464, 7
        %v466 = vsub.s32 0, %v465
        %v467 = vrot.slane %v457, %v466
        %vm468 = vcmp.eq.s32.totalorder %v460, %v467
        %vm469 = vcmp.eq.s32.totalorder %v463, %v467
        %v470 = vsel %vm468, %v438, 0.0
        %v471 = vsel %vm469, %v439, 0.0
        %v472 = vsel %vm444, %v470, 0.0
        %473 = vadd.xlane.f32.xlu0 %v472
        %v474 = vpop.xlane.xlu0 %473
        %v475 = vsel %vm444, %v471, 0.0
        %476 = vadd.xlane.f32.xlu0 %v475
        %v477 = vpop.xlane.xlu0 %476
        %v478 = vld [vmem:[%s302] sm:$0xff]
        %v479 = vld [vmem:[%s302 + $0x8] sm:$0xff]
        %v480 = vrcp.pop %v478
        %v481 = vmul.f32 %v474, %v480
        %v482 = vrcp.pop %v479
        %v483 = vmul.f32 %v477, %v482
        %v484 = vsub.f32 %v481, %v452
        %v485 = vsub.f32 %v483, %v454
        %vm486 = vcmask 7168
        %487 = vst.msk [vmem:[%s309] sm:$0xff] %vm486, %v484
        %488 = vst.msk [vmem:[%s309 + $0x8] sm:$0xff] %vm486, %v485
        %s489 = sand.u32 %s149, 1
        %s490 = scalar_lea.sflag [#allocation3], %s489
        %s491 = sand.u32 %s149, 1
        %s492 = smul.addr %s491, 8
        %s493 = scalar_lea.vmem [#allocation2], %s492
        %s494 = smul.u32 2, %s21
        %p495 = scmp.lt.s32.totalorder %s494, 3
        %s496 = scalar_select %p495, %s494, 3
        %s497 = smul.addr %s496, 8
        %s498 = scalar_lea.vmem %s6, %s497
        // Predicated region
        $region41: #{tpu_custom_call.1} parent=39 // pred_check
          %p499 = pneg %p159
        $region42: #{tpu_custom_call.1} parent=39 // pred_check_branch
          %501 = sbr.rel (%p499) target = $region44
        $region43: #{tpu_custom_call.1} parent=39 // pred_region
          %s502 = smul.u32 2, %s21
          %s504 = ssub.s32 128, 128
          %505 = vsyncadd %s490, %s504
          %s506 = smul.addr %s502, 64
          %s507 = scalar_lea.hbm %s5, %s506
          %s508 = sshll.u32 %s493, 4
          %s509 = int_to_ptr.vmem [resolvable:$true] %s508
          %514 = dma.vmem_to_hbm [thread:$0]  %s509, 128, %s507, %s490, 64, 64, 4
        $region44: #{tpu_custom_call.1} parent=39 // pred_fallthru
          _
        // Predicated region
        $region45: #{tpu_custom_call.1} parent=39 // pred_check
          %p515 = pneg %p185
        $region46: #{tpu_custom_call.1} parent=39 // pred_check_branch
          %517 = sbr.rel (%p515) target = $region48
        $region47: #{tpu_custom_call.1} parent=39 // pred_region
          %s518 = smul.u32 2, %s21
        $region48: #{tpu_custom_call.1} parent=39 // pred_fallthru
          _
      $region40: #{tpu_custom_call.1} parent=5 // pred_fallthru
        _
      %p519 = scmp.le.s32.totalorder 2, %s16
      // Predicated region
      $region49: #{tpu_custom_call.1} parent=5 // pred_check
        %p520 = pneg %p519
      $region50: #{tpu_custom_call.1} parent=5 // pred_check_branch
        %522 = sbr.rel (%p520) target = $region52
      $region51: #{tpu_custom_call.1} parent=5 // pred_region
        %s523 = ssub.s32 %s16, 2
        // Predicated region
        $region53: #{tpu_custom_call.1} parent=51 // pred_check
          %p524 = pneg %p165
        $region54: #{tpu_custom_call.1} parent=51 // pred_check_branch
          %526 = sbr.rel (%p524) target = $region56
        $region55: #{tpu_custom_call.1} parent=51 // pred_region
          %s527 = sand.u32 %s150, 1
          %s528 = scalar_lea.sflag [#allocation3], %s527
          %s529 = sand.u32 %s150, 1
          %s530 = smul.addr %s529, 8
          %s531 = scalar_lea.vmem [#allocation2], %s530
          %532 = dma.done %s528, 128
        $region56: #{tpu_custom_call.1} parent=51 // pred_fallthru
          _
        // Predicated region
        $region57: #{tpu_custom_call.1} parent=51 // pred_check
          %p533 = pneg %p191
        $region58: #{tpu_custom_call.1} parent=51 // pred_check_branch
          %535 = sbr.rel (%p533) target = $region60
        $region59: #{tpu_custom_call.1} parent=51 // pred_region
          %s536 = smul.u32 2, %s22
          %p537 = scmp.lt.s32.totalorder %s536, 3
          %s538 = scalar_select %p537, %s536, 3
          %s539 = smul.addr %s538, 8
          %s540 = scalar_lea.vmem %s6, %s539
        $region60: #{tpu_custom_call.1} parent=51 // pred_fallthru
          _
      $region52: #{tpu_custom_call.1} parent=5 // pred_fallthru
        _
    $region6: #{tpu_custom_call.1} parent=1 // loop_footer
      %s20 = sadd.s32 1, %s16
    $region7: #{tpu_custom_call.1} parent=1 // loop_footer_branch
      %15 = sbr.rel target = $region3
    $region8: #{tpu_custom_call.1} parent=1 // loop_exit
      _
    %541 = vsyncpa [#allocation3], 1
    %s542 = scalar_lea.sflag [#allocation3], 1
    %543 = vsyncpa %s542, 1

</llo_original>
